<compile_context>
chip_gen: v6e
topology: v6e:2x2x1
jax: 0.10.0
libtpu: 0.0.40
codegen_flags: <defaults>
</compile_context>

<pallas_src>
import jax
import jax.numpy as jnp
from jax.experimental import pallas as pl
from jax.experimental.pallas import tpu as pltpu

# ------------------------- configuration (small, lane-friendly) -------------------------
BATCH = 2
CHANNELS = 64                 # PyTorch default channels=64
R = 4                         # PyTorch default r=4
INTER = CHANNELS // R         # 16
H = 16
W = 16
HW = H * W                    # 256 -> multiple of 128 (lane-dense)
EPS = 1e-5


# ----------------------------------------- kernel ---------------------------------------
def _attention_weights(x_bf, w1, b1, w2l, w2g, b2):
    """sigmoid(local_att(x) + global_att(x)) for one (C, HW) tile.

    x_bf: (C, HW) bf16; w1/w2l/w2g bf16; b1/b2 f32.  Returns (C, HW) f32.
    """
    f32 = jnp.float32
    inter = w2l.shape[1]

    # Fused first 1x1 conv of BOTH branches (eval-mode BN folded): W1 = [W1_l ; W1_g].
    y1 = jnp.dot(w1, x_bf, preferred_element_type=f32) + b1              # (2*inter, HW)

    # Local branch: ReLU over the full spatial map.
    h_l = jnp.maximum(y1[:inter, :], 0.0).astype(jnp.bfloat16)           # (inter, HW)

    # Global branch: AdaptiveAvgPool2d(1) commutes with the linear conv + bias,
    # so pool AFTER the fused conv, then ReLU on the pooled vector.
    h_g = jnp.maximum(jnp.mean(y1[inter:, :], axis=-1, keepdims=True), 0.0)  # (inter, 1)

    # Second 1x1 convs: local branch is an MXU matmul (K = inter); the global branch
    # is a rank-1 (C, inter)@(inter, 1) matvec folded into a lane-broadcast bias.
    z_bias = jnp.dot(w2g, h_g.astype(jnp.bfloat16), preferred_element_type=f32) + b2  # (C, 1)
    z = jnp.dot(w2l, h_l, preferred_element_type=f32) + z_bias                        # (C, HW)

    # sigmoid = EUP exp + approximate reciprocal (no VPU divide in the epilogue).
    return pl.reciprocal(1.0 + jnp.exp(-z), approx=True)


def mscam_kernel(x_ref, w1_ref, b1_ref, w2l_ref, w2g_ref, b2_ref, o_ref):
    w1 = w1_ref[...]
    b1 = b1_ref[...]
    w2l = w2l_ref[...]
    w2g = w2g_ref[...]
    b2 = b2_ref[...]

    if len(x_ref.shape) == 2:
        # Per-batch grid step (leading batch dim squeezed away): refs are (C, HW).
        wei = _attention_weights(x_ref[...].astype(jnp.bfloat16), w1, b1, w2l, w2g, b2)
        o_ref[...] = x_ref[...] * wei          # re-read x: keeps vreg pressure low
    else:
        # Whole batch in one grid step: refs are (N, C, HW); N is small and static.
        for i in range(x_ref.shape[0]):
            wei = _attention_weights(x_ref[i].astype(jnp.bfloat16), w1, b1, w2l, w2g, b2)
            o_ref[i] = x_ref[i] * wei


# ----------------------------------------- wrapper --------------------------------------
def _two_tensorcores():
    """True on chips with 2 TensorCores (v7x): keep batch as a parallel grid axis."""
    try:
        kind = jax.devices()[0].device_kind.lower()
    except Exception:
        return False
    return "v7" in kind or "7x" in kind


def mscam_forward(x, fp):
    n, c, h, w = x.shape
    hw = h * w
    x2 = x.reshape(n, c, hw)

    per_batch_grid = _two_tensorcores() and n > 1

    def const_spec(a):
        nd = a.ndim
        return pl.BlockSpec(a.shape, lambda b, _nd=nd: (0,) * _nd)

    if per_batch_grid:
        # v7x: one batch element per TensorCore.
        grid = (n,)
        x_spec = pl.BlockSpec((pl.Squeezed(), c, hw), lambda b: (b, 0, 0))
        o_spec = pl.BlockSpec((pl.Squeezed(), c, hw), lambda b: (b, 0, 0))
    else:
        # v5e / v6e (single TC): one grid step over the whole batch (no per-step overhead).
        grid = (1,)
        x_spec = pl.BlockSpec((n, c, hw), lambda b: (0, 0, 0))
        o_spec = pl.BlockSpec((n, c, hw), lambda b: (0, 0, 0))

    out = pl.pallas_call(
        mscam_kernel,
        out_shape=jax.ShapeDtypeStruct((n, c, hw), jnp.float32),
        grid_spec=pl.GridSpec(
            grid=grid,
            in_specs=[x_spec,
                      const_spec(fp['w1']), const_spec(fp['b1']),
                      const_spec(fp['w2l']), const_spec(fp['w2g']),
                      const_spec(fp['b2'])],
            out_specs=o_spec,
        ),
        compiler_params=pltpu.CompilerParams(dimension_semantics=("parallel",)),
    )(x2, fp['w1'], fp['b1'], fp['w2l'], fp['w2g'], fp['b2'])
    return out.reshape(n, c, h, w)


# ------------------------------- parameter init + BN folding ----------------------------
def init_params(key):
    ks = jax.random.split(key, 24)

    def nrm(k, shape, std):
        return (std * jax.random.normal(k, shape)).astype(jnp.float32)

    def bn(k, ch):
        k1, k2, k3, k4 = jax.random.split(k, 4)
        return dict(
            gamma=jax.random.uniform(k1, (ch,), jnp.float32, 0.5, 1.5),
            beta=nrm(k2, (ch,), 0.1),
            mean=nrm(k3, (ch,), 0.1),
            var=jax.random.uniform(k4, (ch,), jnp.float32, 0.5, 1.5),
        )

    p = {}
    # local_att: Conv2d(C->INTER,1x1) + BN + ReLU + Conv2d(INTER->C,1x1) + BN
    p['wl1'] = nrm(ks[0], (INTER, CHANNELS), 0.15); p['bl1'] = nrm(ks[1], (INTER,), 0.05)
    p['wl2'] = nrm(ks[2], (CHANNELS, INTER), 0.15); p['bl2'] = nrm(ks[3], (CHANNELS,), 0.05)
    p['bnl1'] = bn(ks[4], INTER)
    p['bnl2'] = bn(ks[5], CHANNELS)
    # global_att: AdaptiveAvgPool2d(1) + same conv/BN structure
    p['wg1'] = nrm(ks[6], (INTER, CHANNELS), 0.15); p['bg1'] = nrm(ks[7], (INTER,), 0.05)
    p['wg2'] = nrm(ks[8], (CHANNELS, INTER), 0.15); p['bg2'] = nrm(ks[9], (CHANNELS,), 0.05)
    p['bng1'] = bn(ks[10], INTER)
    p['bng2'] = bn(ks[11], CHANNELS)
    return p


def fold_params(p):
    """Fold eval-mode BatchNorm2d into the 1x1 convs and pack both branches.

    w1  (2*INTER, C) bf16 : [local_conv1 ; global_conv1] (BN1 folded)
    b1  (2*INTER, 1) f32  : matching biases
    w2l (C, INTER)   bf16 : local_conv2 (BN2 folded)
    w2g (C, INTER)   bf16 : global_conv2 (BN2 folded)
    b2  (C, 1)       f32  : bl2 + bg2 (since z = xl + xg)
    """
    def bn_fold(w, b, s):
        scale = s['gamma'] / jnp.sqrt(s['var'] + EPS)
        return scale[:, None] * w, scale * (b - s['mean']) + s['beta']

    wl1, bl1 = bn_fold(p['wl1'], p['bl1'], p['bnl1'])
    wg1, bg1 = bn_fold(p['wg1'], p['bg1'], p['bng1'])
    wl2, bl2 = bn_fold(p['wl2'], p['bl2'], p['bnl2'])
    wg2, bg2 = bn_fold(p['wg2'], p['bg2'], p['bng2'])

    return {
        'w1': jnp.concatenate([wl1, wg1], axis=0).astype(jnp.bfloat16),      # (2*INTER, C)
        'b1': jnp.concatenate([bl1, bg1], axis=0)[:, None].astype(jnp.float32),
        'w2l': wl2.astype(jnp.bfloat16),                                      # (C, INTER)
        'w2g': wg2.astype(jnp.bfloat16),                                      # (C, INTER)
        'b2': (bl2 + bg2)[:, None].astype(jnp.float32),                       # (C, 1)
    }


# -------------------------------------- pure-JAX reference ------------------------------
def reference_forward(x, p):
    def conv1x1(t, wgt, b):
        return jnp.einsum('oi,nihw->nohw', wgt, t) + b[None, :, None, None]

    def bn_eval(t, s):
        scale = s['gamma'] / jnp.sqrt(s['var'] + EPS)
        return (t - s['mean'][None, :, None, None]) * scale[None, :, None, None] \
            + s['beta'][None, :, None, None]

    # local branch
    xl = conv1x1(x, p['wl1'], p['bl1'])
    xl = jnp.maximum(bn_eval(xl, p['bnl1']), 0.0)
    xl = bn_eval(conv1x1(xl, p['wl2'], p['bl2']), p['bnl2'])
    # global branch
    g = jnp.mean(x, axis=(2, 3), keepdims=True)
    xg = conv1x1(g, p['wg1'], p['bg1'])
    xg = jnp.maximum(bn_eval(xg, p['bng1']), 0.0)
    xg = bn_eval(conv1x1(xg, p['wg2'], p['bg2']), p['bng2'])

    wei = jax.nn.sigmoid(xl + xg)
    return x * wei


# --------------------------------------------- main -------------------------------------
if __name__ == "__main__":
    key = jax.random.PRNGKey(0)
    pkey, xkey = jax.random.split(key)
    params = init_params(pkey)
    folded = fold_params(params)
    x = jax.random.normal(xkey, (BATCH, CHANNELS, H, W), dtype=jnp.float32)

    out = mscam_forward(x, folded)
    out = jax.block_until_ready(out)

    ref = reference_forward(x, params)
    assert out.shape == (BATCH, CHANNELS, H, W)
    assert bool(jnp.isfinite(out).all())
    # Tolerance widened vs. the f32 reference because the MXU operands are bf16
    # (f32 accumulation); the f32-operand variant of this kernel is within 1e-3.
    max_err = float(jnp.max(jnp.abs(out - ref)))
    assert max_err < 5e-2, f"max abs err vs reference: {max_err}"
    print("KERNEL_OK")
</pallas_src>

<mosaic_0001>
module attributes {stable_mosaic.version = 11 : i64} {
  func.func @mscam_kernel(%arg0: i32, %arg1: memref<2x64x256xf32, #tpu.memory_space<vmem>>, %arg2: memref<32x64xbf16, #tpu.memory_space<vmem>>, %arg3: memref<32x1xf32, #tpu.memory_space<vmem>>, %arg4: memref<64x16xbf16, #tpu.memory_space<vmem>>, %arg5: memref<64x16xbf16, #tpu.memory_space<vmem>>, %arg6: memref<64x1xf32, #tpu.memory_space<vmem>>, %arg7: memref<2x64x256xf32, #tpu.memory_space<vmem>>) attributes {dimension_semantics = [#tpu.dimension_semantics<parallel>], iteration_bounds = array<i64: 1>, scalar_prefetch = 0 : i64, scratch_operands = 0 : i64, tpu.core_type = #tpu.core_type<tc>, window_params = [{pipeline_mode = #tpu.pipeline_mode<synchronous>, transform_indices = @transform_0, window_bounds = array<i64: 2, 64, 256>}, {pipeline_mode = #tpu.pipeline_mode<synchronous>, transform_indices = @transform_1, window_bounds = array<i64: 32, 64>}, {pipeline_mode = #tpu.pipeline_mode<synchronous>, transform_indices = @transform_2, window_bounds = array<i64: 32, 1>}, {pipeline_mode = #tpu.pipeline_mode<synchronous>, transform_indices = @transform_3, window_bounds = array<i64: 64, 16>}, {pipeline_mode = #tpu.pipeline_mode<synchronous>, transform_indices = @transform_4, window_bounds = array<i64: 64, 16>}, {pipeline_mode = #tpu.pipeline_mode<synchronous>, transform_indices = @transform_5, window_bounds = array<i64: 64, 1>}, {pipeline_mode = #tpu.pipeline_mode<synchronous>, transform_indices = @transform_6, window_bounds = array<i64: 2, 64, 256>}]} {
    %c0 = arith.constant 0 : index
    %c0_0 = arith.constant 0 : index
    %0 = vector.load %arg2[%c0, %c0_0] : memref<32x64xbf16, #tpu.memory_space<vmem>>, vector<32x64xbf16>
    %c0_1 = arith.constant 0 : index
    %c0_2 = arith.constant 0 : index
    %1 = vector.load %arg3[%c0_1, %c0_2] : memref<32x1xf32, #tpu.memory_space<vmem>>, vector<32x1xf32>
    %c0_3 = arith.constant 0 : index
    %c0_4 = arith.constant 0 : index
    %2 = vector.load %arg4[%c0_3, %c0_4] : memref<64x16xbf16, #tpu.memory_space<vmem>>, vector<64x16xbf16>
    %c0_5 = arith.constant 0 : index
    %c0_6 = arith.constant 0 : index
    %3 = vector.load %arg5[%c0_5, %c0_6] : memref<64x16xbf16, #tpu.memory_space<vmem>>, vector<64x16xbf16>
    %c0_7 = arith.constant 0 : index
    %c0_8 = arith.constant 0 : index
    %4 = vector.load %arg6[%c0_7, %c0_8] : memref<64x1xf32, #tpu.memory_space<vmem>>, vector<64x1xf32>
    %c0_9 = arith.constant 0 : index
    %c0_10 = arith.constant 0 : index
    %c0_11 = arith.constant 0 : index
    %5 = vector.load %arg1[%c0_9, %c0_10, %c0_11] : memref<2x64x256xf32, #tpu.memory_space<vmem>>, vector<1x64x256xf32>
    %6 = vector.shape_cast %5 : vector<1x64x256xf32> to vector<64x256xf32>
    %7 = arith.truncf %6 : vector<64x256xf32> to vector<64x256xbf16>
    %cst = arith.constant dense<0.000000e+00> : vector<32x256xf32>
    %8 = tpu.matmul %0, %7, %cst {dimension_numbers = #tpu.dot_dimension_numbers<[1], [0], [0], [1], [0, 0, 1, 1], [], []>} : vector<32x64xbf16>, vector<64x256xbf16>, vector<32x256xf32> -> vector<32x256xf32>
    %9 = vector.broadcast %1 : vector<32x1xf32> to vector<32x256xf32>
    %10 = arith.addf %8, %9 : vector<32x256xf32>
    %11 = vector.extract_strided_slice %10 {offsets = [0, 0], sizes = [16, 256], strides = [1, 1]} : vector<32x256xf32> to vector<16x256xf32>
    %cst_12 = arith.constant 0.000000e+00 : f32
    %12 = vector.broadcast %cst_12 : f32 to vector<16x256xf32>
    %13 = arith.maximumf %11, %12 : vector<16x256xf32>
    %14 = arith.truncf %13 : vector<16x256xf32> to vector<16x256xbf16>
    %15 = vector.extract_strided_slice %10 {offsets = [16, 0], sizes = [16, 256], strides = [1, 1]} : vector<32x256xf32> to vector<16x256xf32>
    %cst_13 = arith.constant dense<0.000000e+00> : vector<16xf32>
    %16 = vector.multi_reduction <add>, %15, %cst_13 [1] : vector<16x256xf32> to vector<16xf32>
    %17 = vector.shape_cast %16 : vector<16xf32> to vector<16x1xf32>
    %cst_14 = arith.constant 2.560000e+02 : f32
    %18 = vector.broadcast %cst_14 : f32 to vector<16x1xf32>
    %19 = arith.divf %17, %18 : vector<16x1xf32>
    %cst_15 = arith.constant 0.000000e+00 : f32
    %20 = vector.broadcast %cst_15 : f32 to vector<16x1xf32>
    %21 = arith.maximumf %19, %20 : vector<16x1xf32>
    %22 = arith.truncf %21 : vector<16x1xf32> to vector<16x1xbf16>
    %cst_16 = arith.constant dense<0.000000e+00> : vector<64x1xf32>
    %23 = tpu.matmul %3, %22, %cst_16 {dimension_numbers = #tpu.dot_dimension_numbers<[1], [0], [0], [1], [0, 0, 1, 1], [], []>} : vector<64x16xbf16>, vector<16x1xbf16>, vector<64x1xf32> -> vector<64x1xf32>
    %24 = arith.addf %23, %4 : vector<64x1xf32>
    %cst_17 = arith.constant dense<0.000000e+00> : vector<64x256xf32>
    %25 = tpu.matmul %2, %14, %cst_17 {dimension_numbers = #tpu.dot_dimension_numbers<[1], [0], [0], [1], [0, 0, 1, 1], [], []>} : vector<64x16xbf16>, vector<16x256xbf16>, vector<64x256xf32> -> vector<64x256xf32>
    %26 = vector.broadcast %24 : vector<64x1xf32> to vector<64x256xf32>
    %27 = arith.addf %25, %26 : vector<64x256xf32>
    %cst_18 = arith.constant 0.000000e+00 : f32
    %28 = vector.broadcast %cst_18 : f32 to vector<64x256xf32>
    %29 = arith.subf %28, %27 : vector<64x256xf32>
    %30 = math.exp %29 : vector<64x256xf32>
    %cst_19 = arith.constant 1.000000e+00 : f32
    %31 = vector.broadcast %cst_19 : f32 to vector<64x256xf32>
    %32 = arith.addf %31, %30 : vector<64x256xf32>
    %33 = tpu.reciprocal %32 {approx = true} : vector<64x256xf32> -> vector<64x256xf32>
    %c0_20 = arith.constant 0 : index
    %c0_21 = arith.constant 0 : index
    %c0_22 = arith.constant 0 : index
    %34 = vector.load %arg1[%c0_20, %c0_21, %c0_22] : memref<2x64x256xf32, #tpu.memory_space<vmem>>, vector<1x64x256xf32>
    %35 = vector.shape_cast %34 : vector<1x64x256xf32> to vector<64x256xf32>
    %36 = arith.mulf %35, %33 : vector<64x256xf32>
    %c0_23 = arith.constant 0 : index
    %c0_24 = arith.constant 0 : index
    %c0_25 = arith.constant 0 : index
    %37 = vector.load %arg7[%c0_23, %c0_24, %c0_25] : memref<2x64x256xf32, #tpu.memory_space<vmem>>, vector<1x64x256xf32>
    %38 = vector.shape_cast %37 : vector<1x64x256xf32> to vector<64x256xf32>
    %39 = vector.shape_cast %36 : vector<64x256xf32> to vector<1x64x256xf32>
    tpu.vector_store %arg7[%c0_23, %c0_24, %c0_25], %39 {strides = array<i32>} : memref<2x64x256xf32, #tpu.memory_space<vmem>>, vector<1x64x256xf32>,
    %c1 = arith.constant 1 : index
    %c0_26 = arith.constant 0 : index
    %c0_27 = arith.constant 0 : index
    %40 = vector.load %arg1[%c1, %c0_26, %c0_27] : memref<2x64x256xf32, #tpu.memory_space<vmem>>, vector<1x64x256xf32>
    %41 = vector.shape_cast %40 : vector<1x64x256xf32> to vector<64x256xf32>
    %42 = arith.truncf %41 : vector<64x256xf32> to vector<64x256xbf16>
    %cst_28 = arith.constant dense<0.000000e+00> : vector<32x256xf32>
    %43 = tpu.matmul %0, %42, %cst_28 {dimension_numbers = #tpu.dot_dimension_numbers<[1], [0], [0], [1], [0, 0, 1, 1], [], []>} : vector<32x64xbf16>, vector<64x256xbf16>, vector<32x256xf32> -> vector<32x256xf32>
    %44 = vector.broadcast %1 : vector<32x1xf32> to vector<32x256xf32>
    %45 = arith.addf %43, %44 : vector<32x256xf32>
    %46 = vector.extract_strided_slice %45 {offsets = [0, 0], sizes = [16, 256], strides = [1, 1]} : vector<32x256xf32> to vector<16x256xf32>
    %cst_29 = arith.constant 0.000000e+00 : f32
    %47 = vector.broadcast %cst_29 : f32 to vector<16x256xf32>
    %48 = arith.maximumf %46, %47 : vector<16x256xf32>
    %49 = arith.truncf %48 : vector<16x256xf32> to vector<16x256xbf16>
    %50 = vector.extract_strided_slice %45 {offsets = [16, 0], sizes = [16, 256], strides = [1, 1]} : vector<32x256xf32> to vector<16x256xf32>
    %cst_30 = arith.constant dense<0.000000e+00> : vector<16xf32>
    %51 = vector.multi_reduction <add>, %50, %cst_30 [1] : vector<16x256xf32> to vector<16xf32>
    %52 = vector.shape_cast %51 : vector<16xf32> to vector<16x1xf32>
    %cst_31 = arith.constant 2.560000e+02 : f32
    %53 = vector.broadcast %cst_31 : f32 to vector<16x1xf32>
    %54 = arith.divf %52, %53 : vector<16x1xf32>
    %cst_32 = arith.constant 0.000000e+00 : f32
    %55 = vector.broadcast %cst_32 : f32 to vector<16x1xf32>
    %56 = arith.maximumf %54, %55 : vector<16x1xf32>
    %57 = arith.truncf %56 : vector<16x1xf32> to vector<16x1xbf16>
    %cst_33 = arith.constant dense<0.000000e+00> : vector<64x1xf32>
    %58 = tpu.matmul %3, %57, %cst_33 {dimension_numbers = #tpu.dot_dimension_numbers<[1], [0], [0], [1], [0, 0, 1, 1], [], []>} : vector<64x16xbf16>, vector<16x1xbf16>, vector<64x1xf32> -> vector<64x1xf32>
    %59 = arith.addf %58, %4 : vector<64x1xf32>
    %cst_34 = arith.constant dense<0.000000e+00> : vector<64x256xf32>
    %60 = tpu.matmul %2, %49, %cst_34 {dimension_numbers = #tpu.dot_dimension_numbers<[1], [0], [0], [1], [0, 0, 1, 1], [], []>} : vector<64x16xbf16>, vector<16x256xbf16>, vector<64x256xf32> -> vector<64x256xf32>
    %61 = vector.broadcast %59 : vector<64x1xf32> to vector<64x256xf32>
    %62 = arith.addf %60, %61 : vector<64x256xf32>
    %cst_35 = arith.constant 0.000000e+00 : f32
    %63 = vector.broadcast %cst_35 : f32 to vector<64x256xf32>
    %64 = arith.subf %63, %62 : vector<64x256xf32>
    %65 = math.exp %64 : vector<64x256xf32>
    %cst_36 = arith.constant 1.000000e+00 : f32
    %66 = vector.broadcast %cst_36 : f32 to vector<64x256xf32>
    %67 = arith.addf %66, %65 : vector<64x256xf32>
    %68 = tpu.reciprocal %67 {approx = true} : vector<64x256xf32> -> vector<64x256xf32>
    %c1_37 = arith.constant 1 : index
    %c0_38 = arith.constant 0 : index
    %c0_39 = arith.constant 0 : index
    %69 = vector.load %arg1[%c1_37, %c0_38, %c0_39] : memref<2x64x256xf32, #tpu.memory_space<vmem>>, vector<1x64x256xf32>
    %70 = vector.shape_cast %69 : vector<1x64x256xf32> to vector<64x256xf32>
    %71 = arith.mulf %70, %68 : vector<64x256xf32>
    %c1_40 = arith.constant 1 : index
    %c0_41 = arith.constant 0 : index
    %c0_42 = arith.constant 0 : index
    %72 = vector.load %arg7[%c1_40, %c0_41, %c0_42] : memref<2x64x256xf32, #tpu.memory_space<vmem>>, vector<1x64x256xf32>
    %73 = vector.shape_cast %72 : vector<1x64x256xf32> to vector<64x256xf32>
    %74 = vector.shape_cast %71 : vector<64x256xf32> to vector<1x64x256xf32>
    tpu.vector_store %arg7[%c1_40, %c0_41, %c0_42], %74 {strides = array<i32>} : memref<2x64x256xf32, #tpu.memory_space<vmem>>, vector<1x64x256xf32>,
    return
  }
  func.func @transform_0(%arg0: i32) -> (i32, i32, i32) {
    %c0_i32 = arith.constant 0 : i32
    %c0_i32_0 = arith.constant 0 : i32
    %c0_i32_1 = arith.constant 0 : i32
    %c0_i32_2 = arith.constant 0 : i32
    return %c0_i32, %c0_i32_0, %c0_i32_1 : i32, i32, i32
  }
  func.func @transform_1(%arg0: i32) -> (i32, i32) {
    %c0_i32 = arith.constant 0 : i32
    %c0_i32_0 = arith.constant 0 : i32
    %c0_i32_1 = arith.constant 0 : i32
    return %c0_i32, %c0_i32_0 : i32, i32
  }
  func.func @transform_2(%arg0: i32) -> (i32, i32) {
    %c0_i32 = arith.constant 0 : i32
    %c0_i32_0 = arith.constant 0 : i32
    %c0_i32_1 = arith.constant 0 : i32
    return %c0_i32, %c0_i32_0 : i32, i32
  }
  func.func @transform_3(%arg0: i32) -> (i32, i32) {
    %c0_i32 = arith.constant 0 : i32
    %c0_i32_0 = arith.constant 0 : i32
    %c0_i32_1 = arith.constant 0 : i32
    return %c0_i32, %c0_i32_0 : i32, i32
  }
  func.func @transform_4(%arg0: i32) -> (i32, i32) {
    %c0_i32 = arith.constant 0 : i32
    %c0_i32_0 = arith.constant 0 : i32
    %c0_i32_1 = arith.constant 0 : i32
    return %c0_i32, %c0_i32_0 : i32, i32
  }
  func.func @transform_5(%arg0: i32) -> (i32, i32) {
    %c0_i32 = arith.constant 0 : i32
    %c0_i32_0 = arith.constant 0 : i32
    %c0_i32_1 = arith.constant 0 : i32
    return %c0_i32, %c0_i32_0 : i32, i32
  }
  func.func @transform_6(%arg0: i32) -> (i32, i32, i32) {
    %c0_i32 = arith.constant 0 : i32
    %c0_i32_0 = arith.constant 0 : i32
    %c0_i32_1 = arith.constant 0 : i32
    %c0_i32_2 = arith.constant 0 : i32
    return %c0_i32, %c0_i32_0, %c0_i32_1 : i32, i32, i32
  }
}

</mosaic_0001>

<llo_original>
// kernel: tpu_custom_call.1
$region0: #{tpu_custom_call.1}
  #allocation0 [shape = 'u32[]', space=smem, size = 0x4, offset = 0x4, fixed_abs, tag = 'smem constant byte address 0x4 - core index']
  #allocation1 [shape = 'u32[144,128]{1,0:T(1,128)}', space=vmem, size = 0x12000, scoped, tag = 'internal scratch']
  %s0 = inlined_call_operand.hbm [shape: f32[2,64,256], index: 0, kind: input, shape index: {}]
  %s1 = inlined_call_operand.vmem [shape: bf16[32,64], index: 1, kind: input, shape index: {}]
  %s2 = inlined_call_operand.vmem [shape: f32[32,1], index: 2, kind: input, shape index: {}]
  %s3 = inlined_call_operand.vmem [shape: bf16[64,16], index: 3, kind: input, shape index: {}]
  %s4 = inlined_call_operand.vmem [shape: bf16[64,16], index: 4, kind: input, shape index: {}]
  %s5 = inlined_call_operand.vmem [shape: f32[64,1], index: 5, kind: input, shape index: {}]
  %s6 = inlined_call_operand.hbm [shape: f32[2,64,256], index: 6, kind: output, shape index: {}]
  %s7 = sld [smem:[#allocation0]]
  $region38: #{tpu_custom_call.1} parent=0
    _
  %s9 = ssub.s32 1, %s7
  %s10 = scalar_select 0, %s9, %s7
  $region1: #{tpu_custom_call.1} parent=0
    #allocation2 [shape = 'u8[131072]{0}', space=vmem, size = 0x20000, scoped, tag = 'input window, operand 0, single buffered']
    #allocation3 [shape = 's32[1]{0}', space=sflag, size = 0x4, scoped, tag = 'scoped memory for tpu_custom_call.1']
    #allocation4 [shape = 's32[1]{0}', space=sflag, size = 0x4, scoped, tag = 'scoped memory for tpu_custom_call.1']
    #allocation5 [shape = 'u8[131072]{0}', space=vmem, size = 0x20000, scoped, tag = 'output window, operand 0, single buffered']
    %11 = vsyncpa [#allocation3], 0
    %12 = vsyncpa [#allocation4], 0
    // Predicated region
    $region2: #{tpu_custom_call.1} parent=1 // pred_check
      _
    $region3: #{tpu_custom_call.1} parent=1 // pred_check_branch
      %14 = sbr.rel (0) target = $region5
    $region4: #{tpu_custom_call.1} parent=1 // pred_region
      %s16 = ssub.s32 4096, 4096
      %17 = vsyncadd [#allocation3], %s16
      %s18 = sshll.u32 [#allocation2], 4
      %s19 = int_to_ptr.vmem [resolvable:$true] %s18
      %24 = dma.hbm_to_vmem [thread:$0]  %s0, 4096, %s19, [#allocation3], 256, 256, 16
    $region5: #{tpu_custom_call.1} parent=1 // pred_fallthru
      _
    // Predicated region
    $region6: #{tpu_custom_call.1} parent=1 // pred_check
      _
    $region7: #{tpu_custom_call.1} parent=1 // pred_check_branch
      %26 = sbr.rel (0) target = $region9
    $region8: #{tpu_custom_call.1} parent=1 // pred_region
      _
    $region9: #{tpu_custom_call.1} parent=1 // pred_fallthru
      _
    // Predicated region
    $region10: #{tpu_custom_call.1} parent=1 // pred_check
      _
    $region11: #{tpu_custom_call.1} parent=1 // pred_check_branch
      %28 = sbr.rel (0) target = $region13
    $region12: #{tpu_custom_call.1} parent=1 // pred_region
      _
    $region13: #{tpu_custom_call.1} parent=1 // pred_fallthru
      _
    // Predicated region
    $region14: #{tpu_custom_call.1} parent=1 // pred_check
      _
    $region15: #{tpu_custom_call.1} parent=1 // pred_check_branch
      %30 = sbr.rel (0) target = $region17
    $region16: #{tpu_custom_call.1} parent=1 // pred_region
      _
    $region17: #{tpu_custom_call.1} parent=1 // pred_fallthru
      _
    // Predicated region
    $region18: #{tpu_custom_call.1} parent=1 // pred_check
      _
    $region19: #{tpu_custom_call.1} parent=1 // pred_check_branch
      %32 = sbr.rel (0) target = $region21
    $region20: #{tpu_custom_call.1} parent=1 // pred_region
      _
    $region21: #{tpu_custom_call.1} parent=1 // pred_fallthru
      _
    // Predicated region
    $region22: #{tpu_custom_call.1} parent=1 // pred_check
      _
    $region23: #{tpu_custom_call.1} parent=1 // pred_check_branch
      %34 = sbr.rel (0) target = $region25
    $region24: #{tpu_custom_call.1} parent=1 // pred_region
      _
    $region25: #{tpu_custom_call.1} parent=1 // pred_fallthru
      _
    // Predicated region
    $region26: #{tpu_custom_call.1} parent=1 // pred_check
      _
    $region27: #{tpu_custom_call.1} parent=1 // pred_check_branch
      %36 = sbr.rel (0) target = $region29
    $region28: #{tpu_custom_call.1} parent=1 // pred_region
      %37 = dma.done [#allocation3], 4096
    $region29: #{tpu_custom_call.1} parent=1 // pred_fallthru
      _
    %v39 = vld [vmem:[%s1] sm:$0xf]
    %v40 = vld [vmem:[%s1 + $0x4] sm:$0xf]
    %v41 = vld [vmem:[%s1 + $0x8] sm:$0xf]
    %v42 = vld [vmem:[%s1 + $0xc] sm:$0xf]
    %v43 = vld [vmem:[%s2] sm:$0xff]
    %v44 = vld [vmem:[%s2 + $0x8] sm:$0xff]
    %v45 = vld [vmem:[%s2 + $0x10] sm:$0xff]
    %v46 = vld [vmem:[%s2 + $0x18] sm:$0xff]
    %v47 = vld [vmem:[%s3] sm:$0xf]
    %v48 = vld [vmem:[%s3 + $0x4] sm:$0xf]
    %v49 = vld [vmem:[%s3 + $0x8] sm:$0xf]
    %v50 = vld [vmem:[%s3 + $0xc] sm:$0xf]
    %v51 = vld [vmem:[%s3 + $0x10] sm:$0xf]
    %v52 = vld [vmem:[%s3 + $0x14] sm:$0xf]
    %v53 = vld [vmem:[%s3 + $0x18] sm:$0xf]
    %v54 = vld [vmem:[%s3 + $0x1c] sm:$0xf]
    %v55 = vld [vmem:[%s4] sm:$0xf]
    %v56 = vld [vmem:[%s4 + $0x4] sm:$0xf]
    %v57 = vld [vmem:[%s4 + $0x8] sm:$0xf]
    %v58 = vld [vmem:[%s4 + $0xc] sm:$0xf]
    %v59 = vld [vmem:[%s4 + $0x10] sm:$0xf]
    %v60 = vld [vmem:[%s4 + $0x14] sm:$0xf]
    %v61 = vld [vmem:[%s4 + $0x18] sm:$0xf]
    %v62 = vld [vmem:[%s4 + $0x1c] sm:$0xf]
    %v63 = vld [vmem:[%s5] sm:$0xff]
    %v64 = vld [vmem:[%s5 + $0x8] sm:$0xff]
    %v65 = vld [vmem:[%s5 + $0x10] sm:$0xff]
    %v66 = vld [vmem:[%s5 + $0x18] sm:$0xff]
    %v67 = vld [vmem:[%s5 + $0x20] sm:$0xff]
    %v68 = vld [vmem:[%s5 + $0x28] sm:$0xff]
    %v69 = vld [vmem:[%s5 + $0x30] sm:$0xff]
    %v70 = vld [vmem:[%s5 + $0x38] sm:$0xff]
    %v71 = vld [vmem:[#allocation2] sm:$0xff]
    %v72 = vld [vmem:[#allocation2 + $0x8] sm:$0xff]
    %v73 = vld [vmem:[#allocation2 + $0x10] sm:$0xff]
    %v74 = vld [vmem:[#allocation2 + $0x18] sm:$0xff]
    %v75 = vld [vmem:[#allocation2 + $0x20] sm:$0xff]
    %v76 = vld [vmem:[#allocation2 + $0x28] sm:$0xff]
    %v77 = vld [vmem:[#allocation2 + $0x30] sm:$0xff]
    %v78 = vld [vmem:[#allocation2 + $0x38] sm:$0xff]
    %v79 = vld [vmem:[#allocation2 + $0x40] sm:$0xff]
    %v80 = vld [vmem:[#allocation2 + $0x48] sm:$0xff]
    %v81 = vld [vmem:[#allocation2 + $0x50] sm:$0xff]
    %v82 = vld [vmem:[#allocation2 + $0x58] sm:$0xff]
    %v83 = vld [vmem:[#allocation2 + $0x60] sm:$0xff]
    %v84 = vld [vmem:[#allocation2 + $0x68] sm:$0xff]
    %v85 = vld [vmem:[#allocation2 + $0x70] sm:$0xff]
    %v86 = vld [vmem:[#allocation2 + $0x78] sm:$0xff]
    %v87 = vpack.c.bf16 %v73, %v71
    %v88 = vpack.c.bf16 %v74, %v72
    %v89 = vpack.c.bf16 %v77, %v75
    %v90 = vpack.c.bf16 %v78, %v76
    %v91 = vpack.c.bf16 %v81, %v79
    %v92 = vpack.c.bf16 %v82, %v80
    %v93 = vpack.c.bf16 %v85, %v83
    %v94 = vpack.c.bf16 %v86, %v84
    %96 = vset.pattern.permute.xlu0 0
    %97 = vperm.xlu0 %96, %v43
    %v98 = vpop.permute.xlu0 %97
    %101 = vset.pattern.permute.xlu0 0
    %102 = vperm.xlu0 %101, %v44
    %v103 = vpop.permute.xlu0 %102
    %106 = vset.pattern.permute.xlu0 0
    %107 = vperm.xlu0 %106, %v45
    %v108 = vpop.permute.xlu0 %107
    %111 = vset.pattern.permute.xlu0 0
    %112 = vperm.xlu0 %111, %v46
    %v113 = vpop.permute.xlu0 %112
    %v119 = vunpack.c.l.b16 %v39
    %v120 = vunpack.c.l.b16 %v40
    %v121 = vunpack.c.l.b16 %v41
    %v122 = vunpack.c.l.b16 %v42
    %v123 = vpack.c.b16 %v120, %v119
    %v124 = vpack.c.b16 %v122, %v121
    %vm125 = vcmask 523264
    %v127 = vsel %vm125, %v123, 0
    %v130 = vsel %vm125, %v124, 0
    %132 = vmatprep.subr.bf16.mxu0 0
    %133 = vmatpush1.bf16.msra.mxu0 0
    %134 = vmatprep.subr.bf16.mxu0 0
    %135 = vmatpush1.bf16.msra.mxu0 0
    %136 = vmatprep.subr.bf16.mxu0 0
    %137 = vmatpush1.bf16.msra.mxu0 0
    %138 = vmatprep.subr.bf16.mxu0 0
    %139 = vmatpush1.bf16.msra.mxu0 0
    %140 = vmatprep.subr.bf16.mxu0 %v94
    %141 = vmatpush1.bf16.msra.mxu0 %v93
    %142 = vmatprep.subr.bf16.mxu0 %v92
    %143 = vmatpush1.bf16.msra.mxu0 %v91
    %144 = vmatprep.subr.bf16.mxu0 %v90
    %145 = vmatpush1.bf16.msra.mxu0 %v89
    %146 = vmatprep.subr.bf16.mxu0 %v88
    %147 = vmatpush1.bf16.msra.mxu0 %v87
    %148 = vmatprep.subr.bf16.mxu0 0
    %149 = vmatpush2.bf16.msra.mxu0 0
    %150 = vmatprep.subr.bf16.mxu0 0
    %151 = vmatpush2.bf16.msra.mxu0 0
    %152 = vmatprep.subr.bf16.mxu0 0
    %153 = vmatpush2.bf16.msra.mxu0 0
    %154 = vmatprep.subr.bf16.mxu0 0
    %155 = vmatpush2.bf16.msra.mxu0 0
    %156 = vmatprep.subr.bf16.mxu0 0
    %157 = vmatpush2.bf16.msra.mxu0 0
    %158 = vmatprep.subr.bf16.mxu0 0
    %159 = vmatpush2.bf16.msra.mxu0 0
    %160 = vmatprep.subr.bf16.mxu0 0
    %161 = vmatpush2.bf16.msra.mxu0 0
    %162 = vmatprep.subr.bf16.mxu0 0
    %163 = vmatpush2.bf16.msra.mxu0 0
    %164 = vmatprep.mubr.bf16.mxu0 0
    %165 = vmatmul.mubr.bf16.gmra.mxu0 %v127
    %v166 = vpop.f32.mrf.mxu0
    %v167 = vadd.f32 %v98, %v166
    %v168 = vpop.f32.mrf.mxu0
    %v169 = vadd.f32 %v98, %v168
    %v170 = vpop.f32.mrf.mxu0
    %v171 = vadd.f32 %v103, %v170
    %v172 = vpop.f32.mrf.mxu0
    %v173 = vadd.f32 %v103, %v172
    %174 = vmatprep.mubr.bf16.mxu0 0
    %175 = vmatmul.mubr.bf16.gmra.mxu0 %v130
    %v176 = vpop.f32.mrf.mxu0
    %v177 = vadd.f32 %v108, %v176
    %v178 = vpop.f32.mrf.mxu0
    %v179 = vadd.f32 %v108, %v178
    %v180 = vpop.f32.mrf.mxu0
    %v181 = vadd.f32 %v113, %v180
    %v182 = vpop.f32.mrf.mxu0
    %v183 = vadd.f32 %v113, %v182
    %184 = vdwg.mxu0
    %v185 = vmax.f32 %v167, 0.0
    %v186 = vmax.f32 %v169, 0.0
    %v187 = vmax.f32 %v171, 0.0
    %v188 = vmax.f32 %v173, 0.0
    %v189 = vpack.c.bf16 %v187, %v185
    %v190 = vpack.c.bf16 %v188, %v186
    %v191 = vadd.f32 %v177, %v179
    %192 = vadd.xlane.f32.xlu0 %v191
    %v193 = vpop.xlane.xlu0 %192
    %v194 = vadd.f32 %v181, %v183
    %195 = vadd.xlane.f32.xlu0 %v194
    %v196 = vpop.xlane.xlu0 %195
    %v197 = vrcp.pop 256.0
    %v198 = vmul.f32 %v193, %v197
    %v199 = vmul.f32 %v196, %v197
    %v200 = vmax.f32 %v198, 0.0
    %v201 = vmax.f32 %v199, 0.0
    %v202 = vpack.c.bf16 %v201, %v200
    %v211 = vunpack.c.l.b16 %v55
    %v212 = vunpack.c.l.b16 %v56
    %v213 = vunpack.c.l.b16 %v57
    %v214 = vunpack.c.l.b16 %v58
    %v215 = vunpack.c.l.b16 %v59
    %v216 = vunpack.c.l.b16 %v60
    %v217 = vunpack.c.l.b16 %v61
    %v218 = vunpack.c.l.b16 %v62
    %v219 = vpack.c.b16 %v212, %v211
    %v220 = vpack.c.b16 %v214, %v213
    %v221 = vpack.c.b16 %v216, %v215
    %v222 = vpack.c.b16 %v218, %v217
    %vm223 = vcmask 130048
    %v225 = vsel %vm223, %v219, 0
    %v228 = vsel %vm223, %v220, 0
    %v231 = vsel %vm223, %v221, 0
    %v234 = vsel %vm223, %v222, 0
    %236 = vmatprep.subr.bf16.mxu0 0
    %237 = vmatpush1.bf16.msra.mxu0 0
    %238 = vmatprep.subr.bf16.mxu0 0
    %239 = vmatpush1.bf16.msra.mxu0 0
    %240 = vmatprep.subr.bf16.mxu0 0
    %241 = vmatpush1.bf16.msra.mxu0 0
    %242 = vmatprep.subr.bf16.mxu0 0
    %243 = vmatpush1.bf16.msra.mxu0 0
    %244 = vmatprep.subr.bf16.mxu0 0
    %245 = vmatpush1.bf16.msra.mxu0 0
    %246 = vmatprep.subr.bf16.mxu0 0
    %247 = vmatpush1.bf16.msra.mxu0 0
    %248 = vmatprep.subr.bf16.mxu0 0
    %249 = vmatpush1.bf16.msra.mxu0 0
    %250 = vmatprep.subr.bf16.mxu0 0
    %251 = vmatpush1.bf16.msra.mxu0 %v202
    %252 = vmatprep.subr.bf16.mxu0 0
    %253 = vmatpush2.bf16.msra.mxu0 0
    %254 = vmatprep.subr.bf16.mxu0 0
    %255 = vmatpush2.bf16.msra.mxu0 0
    %256 = vmatprep.subr.bf16.mxu0 0
    %257 = vmatpush2.bf16.msra.mxu0 0
    %258 = vmatprep.subr.bf16.mxu0 0
    %259 = vmatpush2.bf16.msra.mxu0 0
    %260 = vmatprep.subr.bf16.mxu0 0
    %261 = vmatpush2.bf16.msra.mxu0 0
    %262 = vmatprep.subr.bf16.mxu0 0
    %263 = vmatpush2.bf16.msra.mxu0 0
    %264 = vmatprep.subr.bf16.mxu0 0
    %265 = vmatpush2.bf16.msra.mxu0 0
    %266 = vmatprep.subr.bf16.mxu0 0
    %267 = vmatpush2.bf16.msra.mxu0 0
    %268 = vmatprep.mubr.bf16.mxu0 0
    %269 = vmatmul.mubr.bf16.gmra.mxu0 %v225
    %v270 = vpop.f32.mrf.mxu0
    %v271 = vadd.f32 %v63, %v270
    %v272 = vpop.f32.mrf.mxu0
    %v273 = vpop.f32.mrf.mxu0
    %v274 = vadd.f32 %v64, %v273
    %v275 = vpop.f32.mrf.mxu0
    %276 = vmatprep.mubr.bf16.mxu0 0
    %277 = vmatmul.mubr.bf16.gmra.mxu0 %v228
    %v278 = vpop.f32.mrf.mxu0
    %v279 = vadd.f32 %v65, %v278
    %v280 = vpop.f32.mrf.mxu0
    %v281 = vpop.f32.mrf.mxu0
    %v282 = vadd.f32 %v66, %v281
    %v283 = vpop.f32.mrf.mxu0
    %284 = vmatprep.mubr.bf16.mxu0 0
    %285 = vmatmul.mubr.bf16.gmra.mxu0 %v231
    %v286 = vpop.f32.mrf.mxu0
    %v287 = vadd.f32 %v67, %v286
    %v288 = vpop.f32.mrf.mxu0
    %v289 = vpop.f32.mrf.mxu0
    %v290 = vadd.f32 %v68, %v289
    %v291 = vpop.f32.mrf.mxu0
    %292 = vmatprep.mubr.bf16.mxu0 0
    %293 = vmatmul.mubr.bf16.gmra.mxu0 %v234
    %v294 = vpop.f32.mrf.mxu0
    %v295 = vadd.f32 %v69, %v294
    %v296 = vpop.f32.mrf.mxu0
    %v297 = vpop.f32.mrf.mxu0
    %v298 = vadd.f32 %v70, %v297
    %v299 = vpop.f32.mrf.mxu0
    %300 = vdwg.mxu0
    %302 = vset.pattern.permute.xlu0 0
    %303 = vperm.xlu0 %302, %v271
    %v304 = vpop.permute.xlu0 %303
    %307 = vset.pattern.permute.xlu0 0
    %308 = vperm.xlu0 %307, %v274
    %v309 = vpop.permute.xlu0 %308
    %312 = vset.pattern.permute.xlu0 0
    %313 = vperm.xlu0 %312, %v279
    %v314 = vpop.permute.xlu0 %313
    %317 = vset.pattern.permute.xlu0 0
    %318 = vperm.xlu0 %317, %v282
    %v319 = vpop.permute.xlu0 %318
    %322 = vset.pattern.permute.xlu0 0
    %323 = vperm.xlu0 %322, %v287
    %v324 = vpop.permute.xlu0 %323
    %327 = vset.pattern.permute.xlu0 0
    %328 = vperm.xlu0 %327, %v290
    %v329 = vpop.permute.xlu0 %328
    %332 = vset.pattern.permute.xlu0 0
    %333 = vperm.xlu0 %332, %v295
    %v334 = vpop.permute.xlu0 %333
    %337 = vset.pattern.permute.xlu0 0
    %338 = vperm.xlu0 %337, %v298
    %v339 = vpop.permute.xlu0 %338
    %v349 = vunpack.c.l.b16 %v47
    %v350 = vunpack.c.l.b16 %v48
    %v351 = vunpack.c.l.b16 %v49
    %v352 = vunpack.c.l.b16 %v50
    %v353 = vunpack.c.l.b16 %v51
    %v354 = vunpack.c.l.b16 %v52
    %v355 = vunpack.c.l.b16 %v53
    %v356 = vunpack.c.l.b16 %v54
    %v357 = vpack.c.b16 %v350, %v349
    %v358 = vpack.c.b16 %v352, %v351
    %v359 = vpack.c.b16 %v354, %v353
    %v360 = vpack.c.b16 %v356, %v355
    %v362 = vsel %vm223, %v357, 0
    %v365 = vsel %vm223, %v358, 0
    %v368 = vsel %vm223, %v359, 0
    %v371 = vsel %vm223, %v360, 0
    %373 = vmatprep.subr.bf16.mxu0 0
    %374 = vmatpush1.bf16.msra.mxu0 0
    %375 = vmatprep.subr.bf16.mxu0 0
    %376 = vmatpush1.bf16.msra.mxu0 0
    %377 = vmatprep.subr.bf16.mxu0 0
    %378 = vmatpush1.bf16.msra.mxu0 0
    %379 = vmatprep.subr.bf16.mxu0 0
    %380 = vmatpush1.bf16.msra.mxu0 0
    %381 = vmatprep.subr.bf16.mxu0 0
    %382 = vmatpush1.bf16.msra.mxu0 0
    %383 = vmatprep.subr.bf16.mxu0 0
    %384 = vmatpush1.bf16.msra.mxu0 0
    %385 = vmatprep.subr.bf16.mxu0 0
    %386 = vmatpush1.bf16.msra.mxu0 0
    %387 = vmatprep.subr.bf16.mxu0 %v190
    %388 = vmatpush1.bf16.msra.mxu0 %v189
    %389 = vmatprep.subr.bf16.mxu0 0
    %390 = vmatpush2.bf16.msra.mxu0 0
    %391 = vmatprep.subr.bf16.mxu0 0
    %392 = vmatpush2.bf16.msra.mxu0 0
    %393 = vmatprep.subr.bf16.mxu0 0
    %394 = vmatpush2.bf16.msra.mxu0 0
    %395 = vmatprep.subr.bf16.mxu0 0
    %396 = vmatpush2.bf16.msra.mxu0 0
    %397 = vmatprep.subr.bf16.mxu0 0
    %398 = vmatpush2.bf16.msra.mxu0 0
    %399 = vmatprep.subr.bf16.mxu0 0
    %400 = vmatpush2.bf16.msra.mxu0 0
    %401 = vmatprep.subr.bf16.mxu0 0
    %402 = vmatpush2.bf16.msra.mxu0 0
    %403 = vmatprep.subr.bf16.mxu0 0
    %404 = vmatpush2.bf16.msra.mxu0 0
    %405 = vmatprep.mubr.bf16.mxu0 0
    %406 = vmatmul.mubr.bf16.gmra.mxu0 %v362
    %v407 = vpop.f32.mrf.mxu0
    %v408 = vadd.f32 %v304, %v407
    %v409 = vpop.f32.mrf.mxu0
    %v410 = vadd.f32 %v304, %v409
    %v411 = vpop.f32.mrf.mxu0
    %v412 = vadd.f32 %v309, %v411
    %v413 = vpop.f32.mrf.mxu0
    %v414 = vadd.f32 %v309, %v413
    %415 = vmatprep.mubr.bf16.mxu0 0
    %416 = vmatmul.mubr.bf16.gmra.mxu0 %v365
    %v417 = vpop.f32.mrf.mxu0
    %v418 = vadd.f32 %v314, %v417
    %v419 = vpop.f32.mrf.mxu0
    %v420 = vadd.f32 %v314, %v419
    %v421 = vpop.f32.mrf.mxu0
    %v422 = vadd.f32 %v319, %v421
    %v423 = vpop.f32.mrf.mxu0
    %v424 = vadd.f32 %v319, %v423
    %425 = vmatprep.mubr.bf16.mxu0 0
    %426 = vmatmul.mubr.bf16.gmra.mxu0 %v368
    %v427 = vpop.f32.mrf.mxu0
    %v428 = vadd.f32 %v324, %v427
    %v429 = vpop.f32.mrf.mxu0
    %v430 = vadd.f32 %v324, %v429
    %v431 = vpop.f32.mrf.mxu0
    %v432 = vadd.f32 %v329, %v431
    %v433 = vpop.f32.mrf.mxu0
    %v434 = vadd.f32 %v329, %v433
    %435 = vmatprep.mubr.bf16.mxu0 0
    %436 = vmatmul.mubr.bf16.gmra.mxu0 %v371
    %v437 = vpop.f32.mrf.mxu0
    %v438 = vadd.f32 %v334, %v437
    %v439 = vpop.f32.mrf.mxu0
    %v440 = vadd.f32 %v334, %v439
    %v441 = vpop.f32.mrf.mxu0
    %v442 = vadd.f32 %v339, %v441
    %v443 = vpop.f32.mrf.mxu0
    %v444 = vadd.f32 %v339, %v443
    %445 = vdwg.mxu0
    %v446 = vsub.f32 0.0, %v408
    %v447 = vsub.f32 0.0, %v410
    %v448 = vsub.f32 0.0, %v412
    %v449 = vsub.f32 0.0, %v414
    %v450 = vsub.f32 0.0, %v418
    %v451 = vsub.f32 0.0, %v420
    %v452 = vsub.f32 0.0, %v422
    %v453 = vsub.f32 0.0, %v424
    %v454 = vsub.f32 0.0, %v428
    %v455 = vsub.f32 0.0, %v430
    %v456 = vsub.f32 0.0, %v432
    %v457 = vsub.f32 0.0, %v434
    %v458 = vsub.f32 0.0, %v438
    %v459 = vsub.f32 0.0, %v440
    %v460 = vsub.f32 0.0, %v442
    %v461 = vsub.f32 0.0, %v444
    %v462 = vmul.f32 %v446, 1.442695
    %v463 = vpow.pop %v462
    %v464 = vmul.f32 %v447, 1.442695
    %v465 = vpow.pop %v464
    %v466 = vmul.f32 %v448, 1.442695
    %v467 = vpow.pop %v466
    %v468 = vmul.f32 %v449, 1.442695
    %v469 = vpow.pop %v468
    %v470 = vmul.f32 %v450, 1.442695
    %v471 = vpow.pop %v470
    %v472 = vmul.f32 %v451, 1.442695
    %v473 = vpow.pop %v472
    %v474 = vmul.f32 %v452, 1.442695
    %v475 = vpow.pop %v474
    %v476 = vmul.f32 %v453, 1.442695
    %v477 = vpow.pop %v476
    %v478 = vmul.f32 %v454, 1.442695
    %v479 = vpow.pop %v478
    %v480 = vmul.f32 %v455, 1.442695
    %v481 = vpow.pop %v480
    %v482 = vmul.f32 %v456, 1.442695
    %v483 = vpow.pop %v482
    %v484 = vmul.f32 %v457, 1.442695
    %v485 = vpow.pop %v484
    %v486 = vmul.f32 %v458, 1.442695
    %v487 = vpow.pop %v486
    %v488 = vmul.f32 %v459, 1.442695
    %v489 = vpow.pop %v488
    %v490 = vmul.f32 %v460, 1.442695
    %v491 = vpow.pop %v490
    %v492 = vmul.f32 %v461, 1.442695
    %v493 = vpow.pop %v492
    %v494 = vadd.f32 %v463, 1.0
    %v495 = vadd.f32 %v465, 1.0
    %v496 = vadd.f32 %v467, 1.0
    %v497 = vadd.f32 %v469, 1.0
    %v498 = vadd.f32 %v471, 1.0
    %v499 = vadd.f32 %v473, 1.0
    %v500 = vadd.f32 %v475, 1.0
    %v501 = vadd.f32 %v477, 1.0
    %v502 = vadd.f32 %v479, 1.0
    %v503 = vadd.f32 %v481, 1.0
    %v504 = vadd.f32 %v483, 1.0
    %v505 = vadd.f32 %v485, 1.0
    %v506 = vadd.f32 %v487, 1.0
    %v507 = vadd.f32 %v489, 1.0
    %v508 = vadd.f32 %v491, 1.0
    %v509 = vadd.f32 %v493, 1.0
    %v510 = vrcp.pop %v494
    %v511 = vrcp.pop %v495
    %v512 = vrcp.pop %v496
    %v513 = vrcp.pop %v497
    %v514 = vrcp.pop %v498
    %v515 = vrcp.pop %v499
    %v516 = vrcp.pop %v500
    %v517 = vrcp.pop %v501
    %v518 = vrcp.pop %v502
    %v519 = vrcp.pop %v503
    %v520 = vrcp.pop %v504
    %v521 = vrcp.pop %v505
    %v522 = vrcp.pop %v506
    %v523 = vrcp.pop %v507
    %v524 = vrcp.pop %v508
    %v525 = vrcp.pop %v509
    %v526 = vmul.f32 %v71, %v510
    %v527 = vmul.f32 %v72, %v511
    %v528 = vmul.f32 %v73, %v512
    %v529 = vmul.f32 %v74, %v513
    %v530 = vmul.f32 %v75, %v514
    %v531 = vmul.f32 %v76, %v515
    %v532 = vmul.f32 %v77, %v516
    %v533 = vmul.f32 %v78, %v517
    %v534 = vmul.f32 %v79, %v518
    %v535 = vmul.f32 %v80, %v519
    %v536 = vmul.f32 %v81, %v520
    %v537 = vmul.f32 %v82, %v521
    %v538 = vmul.f32 %v83, %v522
    %v539 = vmul.f32 %v84, %v523
    %v540 = vmul.f32 %v85, %v524
    %v541 = vmul.f32 %v86, %v525
    %542 = vst [vmem:[#allocation5] sm:$0xff] %v526
    %543 = vst [vmem:[#allocation5 + $0x8] sm:$0xff] %v527
    %544 = vst [vmem:[#allocation5 + $0x10] sm:$0xff] %v528
    %545 = vst [vmem:[#allocation5 + $0x18] sm:$0xff] %v529
    %546 = vst [vmem:[#allocation5 + $0x20] sm:$0xff] %v530
    %547 = vst [vmem:[#allocation5 + $0x28] sm:$0xff] %v531
    %548 = vst [vmem:[#allocation5 + $0x30] sm:$0xff] %v532
    %549 = vst [vmem:[#allocation5 + $0x38] sm:$0xff] %v533
    %550 = vst [vmem:[#allocation5 + $0x40] sm:$0xff] %v534
    %551 = vst [vmem:[#allocation5 + $0x48] sm:$0xff] %v535
    %552 = vst [vmem:[#allocation5 + $0x50] sm:$0xff] %v536
    %553 = vst [vmem:[#allocation5 + $0x58] sm:$0xff] %v537
    %554 = vst [vmem:[#allocation5 + $0x60] sm:$0xff] %v538
    %555 = vst [vmem:[#allocation5 + $0x68] sm:$0xff] %v539
    %556 = vst [vmem:[#allocation5 + $0x70] sm:$0xff] %v540
    %557 = vst [vmem:[#allocation5 + $0x78] sm:$0xff] %v541
    %s558 = scalar_lea.vmem [#allocation2], 128
    %v559 = vld [vmem:[%s558] sm:$0xff]
    %v560 = vld [vmem:[%s558 + $0x8] sm:$0xff]
    %v561 = vld [vmem:[%s558 + $0x10] sm:$0xff]
    %v562 = vld [vmem:[%s558 + $0x18] sm:$0xff]
    %v563 = vld [vmem:[%s558 + $0x20] sm:$0xff]
    %v564 = vld [vmem:[%s558 + $0x28] sm:$0xff]
    %v565 = vld [vmem:[%s558 + $0x30] sm:$0xff]
    %v566 = vld [vmem:[%s558 + $0x38] sm:$0xff]
    %v567 = vld [vmem:[%s558 + $0x40] sm:$0xff]
    %v568 = vld [vmem:[%s558 + $0x48] sm:$0xff]
    %v569 = vld [vmem:[%s558 + $0x50] sm:$0xff]
    %v570 = vld [vmem:[%s558 + $0x58] sm:$0xff]
    %v571 = vld [vmem:[%s558 + $0x60] sm:$0xff]
    %v572 = vld [vmem:[%s558 + $0x68] sm:$0xff]
    %v573 = vld [vmem:[%s558 + $0x70] sm:$0xff]
    %v574 = vld [vmem:[%s558 + $0x78] sm:$0xff]
    %v575 = vpack.c.bf16 %v561, %v559
    %v576 = vpack.c.bf16 %v562, %v560
    %v577 = vpack.c.bf16 %v565, %v563
    %v578 = vpack.c.bf16 %v566, %v564
    %v579 = vpack.c.bf16 %v569, %v567
    %v580 = vpack.c.bf16 %v570, %v568
    %v581 = vpack.c.bf16 %v573, %v571
    %v582 = vpack.c.bf16 %v574, %v572
    %583 = vmatprep.subr.bf16.mxu0 0
    %584 = vmatpush1.bf16.msra.mxu0 0
    %585 = vmatprep.subr.bf16.mxu0 0
    %586 = vmatpush1.bf16.msra.mxu0 0
    %587 = vmatprep.subr.bf16.mxu0 0
    %588 = vmatpush1.bf16.msra.mxu0 0
    %589 = vmatprep.subr.bf16.mxu0 0
    %590 = vmatpush1.bf16.msra.mxu0 0
    %591 = vmatprep.subr.bf16.mxu0 %v582
    %592 = vmatpush1.bf16.msra.mxu0 %v581
    %593 = vmatprep.subr.bf16.mxu0 %v580
    %594 = vmatpush1.bf16.msra.mxu0 %v579
    %595 = vmatprep.subr.bf16.mxu0 %v578
    %596 = vmatpush1.bf16.msra.mxu0 %v577
    %597 = vmatprep.subr.bf16.mxu0 %v576
    %598 = vmatpush1.bf16.msra.mxu0 %v575
    %599 = vmatprep.subr.bf16.mxu0 0
    %600 = vmatpush2.bf16.msra.mxu0 0
    %601 = vmatprep.subr.bf16.mxu0 0
    %602 = vmatpush2.bf16.msra.mxu0 0
    %603 = vmatprep.subr.bf16.mxu0 0
    %604 = vmatpush2.bf16.msra.mxu0 0
    %605 = vmatprep.subr.bf16.mxu0 0
    %606 = vmatpush2.bf16.msra.mxu0 0
    %607 = vmatprep.subr.bf16.mxu0 0
    %608 = vmatpush2.bf16.msra.mxu0 0
    %609 = vmatprep.subr.bf16.mxu0 0
    %610 = vmatpush2.bf16.msra.mxu0 0
    %611 = vmatprep.subr.bf16.mxu0 0
    %612 = vmatpush2.bf16.msra.mxu0 0
    %613 = vmatprep.subr.bf16.mxu0 0
    %614 = vmatpush2.bf16.msra.mxu0 0
    %615 = vmatprep.mubr.bf16.mxu0 0
    %616 = vmatmul.mubr.bf16.gmra.mxu0 %v127
    %v617 = vpop.f32.mrf.mxu0
    %v618 = vadd.f32 %v98, %v617
    %v619 = vpop.f32.mrf.mxu0
    %v620 = vadd.f32 %v98, %v619
    %v621 = vpop.f32.mrf.mxu0
    %v622 = vadd.f32 %v103, %v621
    %v623 = vpop.f32.mrf.mxu0
    %v624 = vadd.f32 %v103, %v623
    %625 = vmatprep.mubr.bf16.mxu0 0
    %626 = vmatmul.mubr.bf16.gmra.mxu0 %v130
    %v627 = vpop.f32.mrf.mxu0
    %v628 = vadd.f32 %v108, %v627
    %v629 = vpop.f32.mrf.mxu0
    %v630 = vadd.f32 %v108, %v629
    %v631 = vpop.f32.mrf.mxu0
    %v632 = vadd.f32 %v113, %v631
    %v633 = vpop.f32.mrf.mxu0
    %v634 = vadd.f32 %v113, %v633
    %635 = vdwg.mxu0
    %v636 = vmax.f32 %v618, 0.0
    %v637 = vmax.f32 %v620, 0.0
    %v638 = vmax.f32 %v622, 0.0
    %v639 = vmax.f32 %v624, 0.0
    %v640 = vpack.c.bf16 %v638, %v636
    %v641 = vpack.c.bf16 %v639, %v637
    %v642 = vadd.f32 %v628, %v630
    %643 = vadd.xlane.f32.xlu0 %v642
    %v644 = vpop.xlane.xlu0 %643
    %v645 = vadd.f32 %v632, %v634
    %646 = vadd.xlane.f32.xlu0 %v645
    %v647 = vpop.xlane.xlu0 %646
    %v648 = vmul.f32 %v644, %v197
    %v649 = vmul.f32 %v647, %v197
    %v650 = vmax.f32 %v648, 0.0
    %v651 = vmax.f32 %v649, 0.0
    %v652 = vpack.c.bf16 %v651, %v650
    %653 = vmatprep.subr.bf16.mxu0 0
    %654 = vmatpush1.bf16.msra.mxu0 0
    %655 = vmatprep.subr.bf16.mxu0 0
    %656 = vmatpush1.bf16.msra.mxu0 0
    %657 = vmatprep.subr.bf16.mxu0 0
    %658 = vmatpush1.bf16.msra.mxu0 0
    %659 = vmatprep.subr.bf16.mxu0 0
    %660 = vmatpush1.bf16.msra.mxu0 0
    %661 = vmatprep.subr.bf16.mxu0 0
    %662 = vmatpush1.bf16.msra.mxu0 0
    %663 = vmatprep.subr.bf16.mxu0 0
    %664 = vmatpush1.bf16.msra.mxu0 0
    %665 = vmatprep.subr.bf16.mxu0 0
    %666 = vmatpush1.bf16.msra.mxu0 0
    %667 = vmatprep.subr.bf16.mxu0 0
    %668 = vmatpush1.bf16.msra.mxu0 %v652
    %669 = vmatprep.subr.bf16.mxu0 0
    %670 = vmatpush2.bf16.msra.mxu0 0
    %671 = vmatprep.subr.bf16.mxu0 0
    %672 = vmatpush2.bf16.msra.mxu0 0
    %673 = vmatprep.subr.bf16.mxu0 0
    %674 = vmatpush2.bf16.msra.mxu0 0
    %675 = vmatprep.subr.bf16.mxu0 0
    %676 = vmatpush2.bf16.msra.mxu0 0
    %677 = vmatprep.subr.bf16.mxu0 0
    %678 = vmatpush2.bf16.msra.mxu0 0
    %679 = vmatprep.subr.bf16.mxu0 0
    %680 = vmatpush2.bf16.msra.mxu0 0
    %681 = vmatprep.subr.bf16.mxu0 0
    %682 = vmatpush2.bf16.msra.mxu0 0
    %683 = vmatprep.subr.bf16.mxu0 0
    %684 = vmatpush2.bf16.msra.mxu0 0
    %685 = vmatprep.mubr.bf16.mxu0 0
    %686 = vmatmul.mubr.bf16.gmra.mxu0 %v225
    %v687 = vpop.f32.mrf.mxu0
    %v688 = vadd.f32 %v63, %v687
    %v689 = vpop.f32.mrf.mxu0
    %v690 = vpop.f32.mrf.mxu0
    %v691 = vadd.f32 %v64, %v690
    %v692 = vpop.f32.mrf.mxu0
    %693 = vmatprep.mubr.bf16.mxu0 0
    %694 = vmatmul.mubr.bf16.gmra.mxu0 %v228
    %v695 = vpop.f32.mrf.mxu0
    %v696 = vadd.f32 %v65, %v695
    %v697 = vpop.f32.mrf.mxu0
    %v698 = vpop.f32.mrf.mxu0
    %v699 = vadd.f32 %v66, %v698
    %v700 = vpop.f32.mrf.mxu0
    %701 = vmatprep.mubr.bf16.mxu0 0
    %702 = vmatmul.mubr.bf16.gmra.mxu0 %v231
    %v703 = vpop.f32.mrf.mxu0
    %v704 = vadd.f32 %v67, %v703
    %v705 = vpop.f32.mrf.mxu0
    %v706 = vpop.f32.mrf.mxu0
    %v707 = vadd.f32 %v68, %v706
    %v708 = vpop.f32.mrf.mxu0
    %709 = vmatprep.mubr.bf16.mxu0 0
    %710 = vmatmul.mubr.bf16.gmra.mxu0 %v234
    %v711 = vpop.f32.mrf.mxu0
    %v712 = vadd.f32 %v69, %v711
    %v713 = vpop.f32.mrf.mxu0
    %v714 = vpop.f32.mrf.mxu0
    %v715 = vadd.f32 %v70, %v714
    %v716 = vpop.f32.mrf.mxu0
    %717 = vdwg.mxu0
    %719 = vset.pattern.permute.xlu0 0
    %720 = vperm.xlu0 %719, %v688
    %v721 = vpop.permute.xlu0 %720
    %724 = vset.pattern.permute.xlu0 0
    %725 = vperm.xlu0 %724, %v691
    %v726 = vpop.permute.xlu0 %725
    %729 = vset.pattern.permute.xlu0 0
    %730 = vperm.xlu0 %729, %v696
    %v731 = vpop.permute.xlu0 %730
    %734 = vset.pattern.permute.xlu0 0
    %735 = vperm.xlu0 %734, %v699
    %v736 = vpop.permute.xlu0 %735
    %739 = vset.pattern.permute.xlu0 0
    %740 = vperm.xlu0 %739, %v704
    %v741 = vpop.permute.xlu0 %740
    %744 = vset.pattern.permute.xlu0 0
    %745 = vperm.xlu0 %744, %v707
    %v746 = vpop.permute.xlu0 %745
    %749 = vset.pattern.permute.xlu0 0
    %750 = vperm.xlu0 %749, %v712
    %v751 = vpop.permute.xlu0 %750
    %754 = vset.pattern.permute.xlu0 0
    %755 = vperm.xlu0 %754, %v715
    %v756 = vpop.permute.xlu0 %755
    %758 = vmatprep.subr.bf16.mxu0 0
    %759 = vmatpush1.bf16.msra.mxu0 0
    %760 = vmatprep.subr.bf16.mxu0 0
    %761 = vmatpush1.bf16.msra.mxu0 0
    %762 = vmatprep.subr.bf16.mxu0 0
    %763 = vmatpush1.bf16.msra.mxu0 0
    %764 = vmatprep.subr.bf16.mxu0 0
    %765 = vmatpush1.bf16.msra.mxu0 0
    %766 = vmatprep.subr.bf16.mxu0 0
    %767 = vmatpush1.bf16.msra.mxu0 0
    %768 = vmatprep.subr.bf16.mxu0 0
    %769 = vmatpush1.bf16.msra.mxu0 0
    %770 = vmatprep.subr.bf16.mxu0 0
    %771 = vmatpush1.bf16.msra.mxu0 0
    %772 = vmatprep.subr.bf16.mxu0 %v641
    %773 = vmatpush1.bf16.msra.mxu0 %v640
    %774 = vmatprep.subr.bf16.mxu0 0
    %775 = vmatpush2.bf16.msra.mxu0 0
    %776 = vmatprep.subr.bf16.mxu0 0
    %777 = vmatpush2.bf16.msra.mxu0 0
    %778 = vmatprep.subr.bf16.mxu0 0
    %779 = vmatpush2.bf16.msra.mxu0 0
    %780 = vmatprep.subr.bf16.mxu0 0
    %781 = vmatpush2.bf16.msra.mxu0 0
    %782 = vmatprep.subr.bf16.mxu0 0
    %783 = vmatpush2.bf16.msra.mxu0 0
    %784 = vmatprep.subr.bf16.mxu0 0
    %785 = vmatpush2.bf16.msra.mxu0 0
    %786 = vmatprep.subr.bf16.mxu0 0
    %787 = vmatpush2.bf16.msra.mxu0 0
    %788 = vmatprep.subr.bf16.mxu0 0
    %789 = vmatpush2.bf16.msra.mxu0 0
    %790 = vmatprep.mubr.bf16.mxu0 0
    %791 = vmatmul.mubr.bf16.gmra.mxu0 %v362
    %v792 = vpop.f32.mrf.mxu0
    %v793 = vadd.f32 %v721, %v792
    %v794 = vpop.f32.mrf.mxu0
    %v795 = vadd.f32 %v721, %v794
    %v796 = vpop.f32.mrf.mxu0
    %v797 = vadd.f32 %v726, %v796
    %v798 = vpop.f32.mrf.mxu0
    %v799 = vadd.f32 %v726, %v798
    %800 = vmatprep.mubr.bf16.mxu0 0
    %801 = vmatmul.mubr.bf16.gmra.mxu0 %v365
    %v802 = vpop.f32.mrf.mxu0
    %v803 = vadd.f32 %v731, %v802
    %v804 = vpop.f32.mrf.mxu0
    %v805 = vadd.f32 %v731, %v804
    %v806 = vpop.f32.mrf.mxu0
    %v807 = vadd.f32 %v736, %v806
    %v808 = vpop.f32.mrf.mxu0
    %v809 = vadd.f32 %v736, %v808
    %810 = vmatprep.mubr.bf16.mxu0 0
    %811 = vmatmul.mubr.bf16.gmra.mxu0 %v368
    %v812 = vpop.f32.mrf.mxu0
    %v813 = vadd.f32 %v741, %v812
    %v814 = vpop.f32.mrf.mxu0
    %v815 = vadd.f32 %v741, %v814
    %v816 = vpop.f32.mrf.mxu0
    %v817 = vadd.f32 %v746, %v816
    %v818 = vpop.f32.mrf.mxu0
    %v819 = vadd.f32 %v746, %v818
    %820 = vmatprep.mubr.bf16.mxu0 0
    %821 = vmatmul.mubr.bf16.gmra.mxu0 %v371
    %v822 = vpop.f32.mrf.mxu0
    %v823 = vadd.f32 %v751, %v822
    %v824 = vpop.f32.mrf.mxu0
    %v825 = vadd.f32 %v751, %v824
    %v826 = vpop.f32.mrf.mxu0
    %v827 = vadd.f32 %v756, %v826
    %v828 = vpop.f32.mrf.mxu0
    %v829 = vadd.f32 %v756, %v828
    %830 = vdwg.mxu0
    %v831 = vsub.f32 0.0, %v793
    %v832 = vsub.f32 0.0, %v795
    %v833 = vsub.f32 0.0, %v797
    %v834 = vsub.f32 0.0, %v799
    %v835 = vsub.f32 0.0, %v803
    %v836 = vsub.f32 0.0, %v805
    %v837 = vsub.f32 0.0, %v807
    %v838 = vsub.f32 0.0, %v809
    %v839 = vsub.f32 0.0, %v813
    %v840 = vsub.f32 0.0, %v815
    %v841 = vsub.f32 0.0, %v817
    %v842 = vsub.f32 0.0, %v819
    %v843 = vsub.f32 0.0, %v823
    %v844 = vsub.f32 0.0, %v825
    %v845 = vsub.f32 0.0, %v827
    %v846 = vsub.f32 0.0, %v829
    %v847 = vmul.f32 %v831, 1.442695
    %v848 = vpow.pop %v847
    %v849 = vmul.f32 %v832, 1.442695
    %v850 = vpow.pop %v849
    %v851 = vmul.f32 %v833, 1.442695
    %v852 = vpow.pop %v851
    %v853 = vmul.f32 %v834, 1.442695
    %v854 = vpow.pop %v853
    %v855 = vmul.f32 %v835, 1.442695
    %v856 = vpow.pop %v855
    %v857 = vmul.f32 %v836, 1.442695
    %v858 = vpow.pop %v857
    %v859 = vmul.f32 %v837, 1.442695
    %v860 = vpow.pop %v859
    %v861 = vmul.f32 %v838, 1.442695
    %v862 = vpow.pop %v861
    %v863 = vmul.f32 %v839, 1.442695
    %v864 = vpow.pop %v863
    %v865 = vmul.f32 %v840, 1.442695
    %v866 = vpow.pop %v865
    %v867 = vmul.f32 %v841, 1.442695
    %v868 = vpow.pop %v867
    %v869 = vmul.f32 %v842, 1.442695
    %v870 = vpow.pop %v869
    %v871 = vmul.f32 %v843, 1.442695
    %v872 = vpow.pop %v871
    %v873 = vmul.f32 %v844, 1.442695
    %v874 = vpow.pop %v873
    %v875 = vmul.f32 %v845, 1.442695
    %v876 = vpow.pop %v875
    %v877 = vmul.f32 %v846, 1.442695
    %v878 = vpow.pop %v877
    %v879 = vadd.f32 %v848, 1.0
    %v880 = vadd.f32 %v850, 1.0
    %v881 = vadd.f32 %v852, 1.0
    %v882 = vadd.f32 %v854, 1.0
    %v883 = vadd.f32 %v856, 1.0
    %v884 = vadd.f32 %v858, 1.0
    %v885 = vadd.f32 %v860, 1.0
    %v886 = vadd.f32 %v862, 1.0
    %v887 = vadd.f32 %v864, 1.0
    %v888 = vadd.f32 %v866, 1.0
    %v889 = vadd.f32 %v868, 1.0
    %v890 = vadd.f32 %v870, 1.0
    %v891 = vadd.f32 %v872, 1.0
    %v892 = vadd.f32 %v874, 1.0
    %v893 = vadd.f32 %v876, 1.0
    %v894 = vadd.f32 %v878, 1.0
    %v895 = vrcp.pop %v879
    %v896 = vrcp.pop %v880
    %v897 = vrcp.pop %v881
    %v898 = vrcp.pop %v882
    %v899 = vrcp.pop %v883
    %v900 = vrcp.pop %v884
    %v901 = vrcp.pop %v885
    %v902 = vrcp.pop %v886
    %v903 = vrcp.pop %v887
    %v904 = vrcp.pop %v888
    %v905 = vrcp.pop %v889
    %v906 = vrcp.pop %v890
    %v907 = vrcp.pop %v891
    %v908 = vrcp.pop %v892
    %v909 = vrcp.pop %v893
    %v910 = vrcp.pop %v894
    %v911 = vmul.f32 %v559, %v895
    %v912 = vmul.f32 %v560, %v896
    %v913 = vmul.f32 %v561, %v897
    %v914 = vmul.f32 %v562, %v898
    %v915 = vmul.f32 %v563, %v899
    %v916 = vmul.f32 %v564, %v900
    %v917 = vmul.f32 %v565, %v901
    %v918 = vmul.f32 %v566, %v902
    %v919 = vmul.f32 %v567, %v903
    %v920 = vmul.f32 %v568, %v904
    %v921 = vmul.f32 %v569, %v905
    %v922 = vmul.f32 %v570, %v906
    %v923 = vmul.f32 %v571, %v907
    %v924 = vmul.f32 %v572, %v908
    %v925 = vmul.f32 %v573, %v909
    %v926 = vmul.f32 %v574, %v910
    %s927 = scalar_lea.vmem [#allocation5], 128
    %928 = vst [vmem:[%s927] sm:$0xff] %v911
    %929 = vst [vmem:[%s927 + $0x8] sm:$0xff] %v912
    %930 = vst [vmem:[%s927 + $0x10] sm:$0xff] %v913
    %931 = vst [vmem:[%s927 + $0x18] sm:$0xff] %v914
    %932 = vst [vmem:[%s927 + $0x20] sm:$0xff] %v915
    %933 = vst [vmem:[%s927 + $0x28] sm:$0xff] %v916
    %934 = vst [vmem:[%s927 + $0x30] sm:$0xff] %v917
    %935 = vst [vmem:[%s927 + $0x38] sm:$0xff] %v918
    %936 = vst [vmem:[%s927 + $0x40] sm:$0xff] %v919
    %937 = vst [vmem:[%s927 + $0x48] sm:$0xff] %v920
    %938 = vst [vmem:[%s927 + $0x50] sm:$0xff] %v921
    %939 = vst [vmem:[%s927 + $0x58] sm:$0xff] %v922
    %940 = vst [vmem:[%s927 + $0x60] sm:$0xff] %v923
    %941 = vst [vmem:[%s927 + $0x68] sm:$0xff] %v924
    %942 = vst [vmem:[%s927 + $0x70] sm:$0xff] %v925
    %943 = vst [vmem:[%s927 + $0x78] sm:$0xff] %v926
    // Predicated region
    $region30: #{tpu_custom_call.1} parent=1 // pred_check
      _
    $region31: #{tpu_custom_call.1} parent=1 // pred_check_branch
      %945 = sbr.rel (0) target = $region33
    $region32: #{tpu_custom_call.1} parent=1 // pred_region
      %s947 = ssub.s32 4096, 4096
      %948 = vsyncadd [#allocation4], %s947
      %s949 = sshll.u32 [#allocation5], 4
      %s950 = int_to_ptr.vmem [resolvable:$true] %s949
      %955 = dma.vmem_to_hbm [thread:$0]  %s950, 4096, %s6, [#allocation4], 256, 256, 16
    $region33: #{tpu_custom_call.1} parent=1 // pred_fallthru
      _
    // Predicated region
    $region34: #{tpu_custom_call.1} parent=1 // pred_check
      _
    $region35: #{tpu_custom_call.1} parent=1 // pred_check_branch
      %957 = sbr.rel (0) target = $region37
    $region36: #{tpu_custom_call.1} parent=1 // pred_region
      %958 = dma.done [#allocation4], 4096
    $region37: #{tpu_custom_call.1} parent=1 // pred_fallthru
      _
    %959 = vsyncpa [#allocation3], 1
    %960 = vsyncpa [#allocation4], 1

</llo_original>
